<compile_context>
chip_gen: v7x
topology: tpu7x:2x2x1
jax: 0.10.0
libtpu: 0.0.40
codegen_flags: <defaults>
</compile_context>

<pallas_src>
import math

import jax
import jax.numpy as jnp
from jax.experimental import pallas as pl
from jax.experimental.pallas import tpu as pltpu


def _upconv_kernel(x_ref, w_ref, o_ref):
    """One (batch-tile, row-tile) step of the stride-2 2x2 deconv.

    x_ref: (bt, C_in, th*W)         bt images, th NCHW input rows each, spatially flat
    w_ref: (C_in, KH*KW*C_out)      fused weight, columns ordered kh-major, (kw,co)-minor
    o_ref: (bt, th, 2, W, 2*C_out)  NHWC-view output rows 2h / 2h+1 for those rows
    """
    bt, th = o_ref.shape[0], o_ref.shape[1]
    w_len, kwco = o_ref.shape[3], o_ref.shape[4]

    wmat = w_ref[...]
    dn = (((0,), (0,)), ((), ()))               # contract the channel axis of both

    for b in range(bt):                         # static unroll over bundled images
        x = x_ref[b].astype(wmat.dtype)         # (C_in, th*W), lane-dense
        # One MXU matmul per image; f32 accumulation regardless of operand dtype.
        r = jax.lax.dot_general(x, wmat, dn,
                                preferred_element_type=jnp.float32)   # (th*W, 2*kwco)
        for kh in range(2):
            rk = r[:, kh * kwco:(kh + 1) * kwco]                      # (th*W, 2*C_out)
            # Sublane-aligned leading split (free when W % 8 == 0); every row is
            # already an NHWC row of the upsampled image, (kw, co)-minor.
            o_ref[b, :, kh, :, :] = rk.reshape(th, w_len, kwco).astype(o_ref.dtype)


def _pad_to(v, m):
    return ((v + m - 1) // m) * m


def _vmem_config():
    """(vmem_limit_bytes, per-step working-set budget) for the local TPU generation."""
    phys = 64 * 1024 * 1024                      # conservative default (v7x per-TC VMEM)
    try:
        info = pltpu.get_tpu_info()
        phys = int(getattr(info, "vmem_capacity_bytes", phys))
    except Exception:
        pass
    limit = min(64 * 1024 * 1024, (3 * phys) // 4)   # 64 MiB on v5e/v6e, 48 MiB on v7x
    budget = (7 * limit) // 10                        # headroom for Mosaic internal scratch
    return int(limit), int(budget)


def _step_vmem_bytes(bt, th, W, C_in, C_out, x_item, w_item, o_item):
    """VMEM working set of one grid step, padded to the (8,128) vreg tiling."""
    KH = KW = 2
    x_blk = bt * _pad_to(C_in, 8) * _pad_to(th * W, 128) * x_item
    o_blk = bt * th * KH * _pad_to(W, 8) * _pad_to(KW * C_out, 128) * o_item
    r_tmp = min(bt, 2) * _pad_to(th * W, 8) * _pad_to(KH * KW * C_out, 128) * 4  # f32 dot result
    w_res = _pad_to(C_in, 8) * _pad_to(KH * KW * C_out, 128) * w_item
    return 2 * (x_blk + o_blk) + r_tmp + w_res        # x / out double-buffered


def _pick_tiles(N, H, W, C_in, C_out, x_item, w_item, o_item, target_pixels, budget):
    """Choose (batch_tile, row_tile) for the grid.

    Keeps th*W a multiple of 128 (lane-dense x tile; also legal when th == H),
    keeps the double-buffered working set under `budget`, bundles several whole
    images per step at low resolution (amortizes the ~0.35us step overhead) and
    guarantees >= 2 grid steps when N == 1 so both v7x TensorCores get work.
    """
    q = 128 // math.gcd(W, 128)      # smallest row step with (q * W) % 128 == 0

    def fits(bt, th):
        return _step_vmem_bytes(bt, th, W, C_in, C_out, x_item, w_item, o_item) <= budget

    if H * W <= max(target_pixels, 128) and fits(1, H):
        th = H                        # whole image per step (always layout-legal)
    else:
        th = min(max(target_pixels // max(W, 1), q) // q * q, max((H // q) * q, q))
        th = max(th, q)
        while th > q and not fits(1, th):
            th -= q
        if th >= H:
            th = H

    bt = 1
    if th >= H and N >= 4:
        # Low-resolution stage: carry several images per grid step, but keep the
        # batch grid >= 2 so megacore sharding / pipelining still have work.
        max_bt = min(8, N // 2)
        while 2 * bt <= max_bt and 2 * bt * H * W <= 2 * target_pixels and fits(2 * bt, H):
            bt *= 2

    if N == 1 and th >= H and H > q:
        # A (1, 1) grid would leave one v7x TensorCore idle and remove all
        # DMA/compute overlap; split the rows into >= 2 tiles instead.
        th = max(q, ((H // 2) // q) * q)

    return bt, th


def up_conv_transpose2d(x_nchw, weight, *, channels_last=False, compute_dtype=None,
                        target_pixels=8192):
    """ConvTranspose2d(kernel_size=2, stride=2, padding=0, bias=False).

    x_nchw : (N, C_in, H, W)       PyTorch NCHW activation layout
    weight : (C_in, C_out, 2, 2)   PyTorch ConvTranspose2d weight layout
    channels_last : return NHWC (N, 2H, 2W, C_out) and skip the final layout
                    pass over the 4x-upsampled output (preferred downstream).
    compute_dtype : e.g. jnp.bfloat16 -- MXU operand dtype (f32 accumulation).
                    None keeps the input dtype for exact parity with PyTorch.
                    Note: an f32 weight is cast to this dtype.
    returns: (N, C_out, 2H, 2W), or (N, 2H, 2W, C_out) if channels_last=True.
    """
    N, C_in, H, W = x_nchw.shape
    C_in_w, C_out, KH, KW = weight.shape
    assert C_in == C_in_w and KH == 2 and KW == 2, "UpConv is a fixed 2x2/stride-2 deconv"
    # NOTE: W % 8 == 0 keeps the in-kernel (th*W, 2*C_out) -> (th, W, 2*C_out)
    # reshape a free sublane split; other widths stay correct but relayout-slower.

    out_dtype = x_nchw.dtype
    w_dtype = jnp.dtype(compute_dtype) if compute_dtype is not None else jnp.dtype(out_dtype)
    x_item = jnp.dtype(out_dtype).itemsize
    w_item = jnp.dtype(w_dtype).itemsize

    # Free views / tiny reorders -- no HBM pass over the activation.
    x_flat = x_nchw.reshape(N, C_in, H * W)                                   # NCHW view
    # Fused weight, columns ordered (kh, kw, co): one dot yields both row parities.
    w2 = jnp.transpose(weight, (0, 2, 3, 1)).reshape(C_in, KH * KW * C_out).astype(w_dtype)

    vmem_limit, budget = _vmem_config()
    bt, th = _pick_tiles(N, H, W, C_in, C_out, x_item, w_item, x_item,
                         target_pixels, budget)
    grid = (pl.cdiv(N, bt), pl.cdiv(H, th))

    cost = pl.CostEstimate(
        flops=2 * N * H * W * C_in * KH * KW * C_out,
        transcendentals=0,
        bytes_accessed=(x_flat.size * x_item + w2.size * w_item
                        + N * KH * KW * H * W * C_out * x_item),
    )

    out_k = pl.pallas_call(
        _upconv_kernel,
        out_shape=jax.ShapeDtypeStruct((N, H, KH, W, KW * C_out), out_dtype),
        grid_spec=pltpu.PrefetchScalarGridSpec(
            num_scalar_prefetch=0,
            grid=grid,
            in_specs=[
                # bt images x th rows, channels-major, spatially flattened.
                pl.BlockSpec((bt, C_in, th * W), lambda n, i: (n, 0, i)),
                # Full fused weight, resident in VMEM across the whole grid.
                pl.BlockSpec((C_in, KH * KW * C_out), lambda n, i: (0, 0)),
            ],
            # NHWC-view output rows 2h / 2h+1 for the same th input rows.
            out_specs=pl.BlockSpec((bt, th, KH, W, KW * C_out),
                                   lambda n, i: (n, i, 0, 0, 0)),
        ),
        compiler_params=pltpu.CompilerParams(
            dimension_semantics=("parallel", "parallel"),
            vmem_limit_bytes=vmem_limit,
        ),
        cost_estimate=cost,
    )(x_flat, w2)

    # (N, H, 2, W, 2*C_out) is byte-identical to NHWC (N, 2H, 2W, C_out).
    out_nhwc = out_k.reshape(N, 2 * H, 2 * W, C_out)
    if channels_last:
        return out_nhwc
    # One layout pass to honour the PyTorch module's NCHW return convention.
    # TODO(synk): emit NCHW from the kernel (kw lane-interleave via roll/select on
    # the otherwise-idle XLU) to remove this read+write pass over the 4x output.
    return jnp.transpose(out_nhwc, (0, 3, 1, 2))


if __name__ == "__main__":
    def reference(x, w):
        n, c_in, h, wdt = x.shape
        c_out = w.shape[1]
        return jnp.einsum("nchw,cokl->nohkwl", x, w).reshape(n, c_out, 2 * h, 2 * wdt)

    key = jax.random.PRNGKey(0)
    k1, k2, k3, k4, k5, k6 = jax.random.split(key, 6)

    # 1) Module-sized check (in_channels=4, out_channels=8), default NCHW path.
    x = jax.random.normal(k1, (2, 4, 16, 16), dtype=jnp.float32)
    w = jax.random.normal(k2, (4, 8, 2, 2), dtype=jnp.float32) * 0.1
    out = jax.block_until_ready(up_conv_transpose2d(x, w))
    ref = reference(x, w)
    assert out.shape == (2, 8, 32, 32)
    assert jnp.allclose(out, ref, atol=1e-4, rtol=1e-4), "NCHW mismatch vs reference"

    # 1b) Transpose-free channels_last path.
    out_cl = jax.block_until_ready(up_conv_transpose2d(x, w, channels_last=True))
    assert jnp.allclose(out_cl, jnp.transpose(ref, (0, 2, 3, 1)),
                        atol=1e-4, rtol=1e-4), "NHWC mismatch vs reference"

    # 2) N == 1 with H not divisible by the row tile: exercises the >=2-row-tile
    #    rule (both v7x TensorCores) and the padded/dropped tail block.
    x2 = jax.random.normal(k3, (1, 16, 20, 16), dtype=jnp.float32)
    w2_ = jax.random.normal(k4, (16, 32, 2, 2), dtype=jnp.float32) * 0.1
    out2 = jax.block_until_ready(up_conv_transpose2d(x2, w2_))
    assert out2.shape == (1, 32, 40, 32)
    assert jnp.allclose(out2, reference(x2, w2_), atol=1e-4, rtol=1e-4), "tail mismatch"

    # 3) Batch-bundled low-resolution path (several images per grid step).
    x3 = jax.random.normal(k5, (8, 4, 16, 16), dtype=jnp.float32)
    w3 = jax.random.normal(k6, (4, 8, 2, 2), dtype=jnp.float32) * 0.1
    out3 = jax.block_until_ready(up_conv_transpose2d(x3, w3))
    assert jnp.allclose(out3, reference(x3, w3), atol=1e-4, rtol=1e-4), "batch-tile mismatch"

    # 4) bf16 MXU operands with f32 accumulation -- the v6e/v7x fast path.
    out_bf = jax.block_until_ready(up_conv_transpose2d(x, w, compute_dtype=jnp.bfloat16))
    assert jnp.allclose(out_bf, ref, atol=5e-2, rtol=5e-2), "bf16 compute mismatch"

    print("KERNEL_OK")
</pallas_src>

<mosaic_0001>
module attributes {stable_mosaic.version = 11 : i64} {
  func.func @_upconv_kernel(%arg0: i32, %arg1: i32, %arg2: memref<1x4x256xf32, #tpu.memory_space<vmem>>, %arg3: memref<4x32xf32, #tpu.memory_space<vmem>>, %arg4: memref<1x16x2x16x16xf32, #tpu.memory_space<vmem>>) attributes {dimension_semantics = [#tpu.dimension_semantics<parallel>, #tpu.dimension_semantics<parallel>], iteration_bounds = array<i64: 2, 1>, scalar_prefetch = 0 : i64, scratch_operands = 0 : i64, tpu.core_type = #tpu.core_type<tc>, window_params = [{transform_indices = @transform_0, window_bounds = array<i64: 1, 4, 256>}, {pipeline_mode = #tpu.pipeline_mode<synchronous>, transform_indices = @transform_1, window_bounds = array<i64: 4, 32>}, {transform_indices = @transform_2, window_bounds = array<i64: 1, 16, 2, 16, 16>}]} {
    %c0 = arith.constant 0 : index
    %c0_0 = arith.constant 0 : index
    %0 = vector.load %arg3[%c0, %c0_0] : memref<4x32xf32, #tpu.memory_space<vmem>>, vector<4x32xf32>
    %c0_1 = arith.constant 0 : index
    %c0_2 = arith.constant 0 : index
    %c0_3 = arith.constant 0 : index
    %1 = vector.load %arg2[%c0_1, %c0_2, %c0_3] : memref<1x4x256xf32, #tpu.memory_space<vmem>>, vector<1x4x256xf32>
    %2 = vector.shape_cast %1 : vector<1x4x256xf32> to vector<4x256xf32>
    %cst = arith.constant dense<0.000000e+00> : vector<256x32xf32>
    %3 = tpu.matmul %2, %0, %cst {dimension_numbers = #tpu.dot_dimension_numbers<[0], [0], [1], [1], [0, 1, 1, 1], [], []>} : vector<4x256xf32>, vector<4x32xf32>, vector<256x32xf32> -> vector<256x32xf32>
    %4 = vector.extract_strided_slice %3 {offsets = [0, 0], sizes = [256, 16], strides = [1, 1]} : vector<256x32xf32> to vector<256x16xf32>
    %5 = vector.shape_cast %4 : vector<256x16xf32> to vector<16x16x16xf32>
    %c0_4 = arith.constant 0 : index
    %c0_5 = arith.constant 0 : index
    %c0_6 = arith.constant 0 : index
    %c0_7 = arith.constant 0 : index
    %c0_8 = arith.constant 0 : index
    %6 = vector.load %arg4[%c0_4, %c0_5, %c0_6, %c0_7, %c0_8] : memref<1x16x2x16x16xf32, #tpu.memory_space<vmem>>, vector<1x16x1x16x16xf32>
    %7 = vector.shape_cast %6 : vector<1x16x1x16x16xf32> to vector<16x16x16xf32>
    %8 = vector.shape_cast %5 : vector<16x16x16xf32> to vector<1x16x1x16x16xf32>
    tpu.vector_store %arg4[%c0_4, %c0_5, %c0_6, %c0_7, %c0_8], %8 {strides = array<i32>} : memref<1x16x2x16x16xf32, #tpu.memory_space<vmem>>, vector<1x16x1x16x16xf32>,
    %9 = vector.extract_strided_slice %3 {offsets = [0, 16], sizes = [256, 16], strides = [1, 1]} : vector<256x32xf32> to vector<256x16xf32>
    %10 = vector.shape_cast %9 : vector<256x16xf32> to vector<16x16x16xf32>
    %c0_9 = arith.constant 0 : index
    %c0_10 = arith.constant 0 : index
    %c1 = arith.constant 1 : index
    %c0_11 = arith.constant 0 : index
    %c0_12 = arith.constant 0 : index
    %11 = vector.load %arg4[%c0_9, %c0_10, %c1, %c0_11, %c0_12] : memref<1x16x2x16x16xf32, #tpu.memory_space<vmem>>, vector<1x16x1x16x16xf32>
    %12 = vector.shape_cast %11 : vector<1x16x1x16x16xf32> to vector<16x16x16xf32>
    %13 = vector.shape_cast %10 : vector<16x16x16xf32> to vector<1x16x1x16x16xf32>
    tpu.vector_store %arg4[%c0_9, %c0_10, %c1, %c0_11, %c0_12], %13 {strides = array<i32>} : memref<1x16x2x16x16xf32, #tpu.memory_space<vmem>>, vector<1x16x1x16x16xf32>,
    return
  }
  func.func @transform_0(%arg0: i32, %arg1: i32) -> (i32, i32, i32) {
    %c0_i32 = arith.constant 0 : i32
    %c0_i32_0 = arith.constant 0 : i32
    return %arg0, %c0_i32, %arg1 : i32, i32, i32
  }
  func.func @transform_1(%arg0: i32, %arg1: i32) -> (i32, i32) {
    %c0_i32 = arith.constant 0 : i32
    %c0_i32_0 = arith.constant 0 : i32
    %c0_i32_1 = arith.constant 0 : i32
    return %c0_i32, %c0_i32_0 : i32, i32
  }
  func.func @transform_2(%arg0: i32, %arg1: i32) -> (i32, i32, i32, i32, i32) {
    %c0_i32 = arith.constant 0 : i32
    %c0_i32_0 = arith.constant 0 : i32
    %c0_i32_1 = arith.constant 0 : i32
    %c0_i32_2 = arith.constant 0 : i32
    return %arg0, %arg1, %c0_i32, %c0_i32_0, %c0_i32_1 : i32, i32, i32, i32, i32
  }
}

</mosaic_0001>

<llo_original>
// kernel: tpu_custom_call.1
$region0: #{tpu_custom_call.1}
  #allocation0 [shape = 'u32[]', space=smem, size = 0x4, offset = 0x4, fixed_abs, tag = 'smem constant byte address 0x4 - core index']
  #allocation1 [shape = 'u32[144,128]{1,0:T(1,128)}', space=vmem, size = 0x12000, scoped, tag = 'internal scratch']
  %s0 = inlined_call_operand.hbm [shape: f32[2,4,256], index: 0, kind: input, shape index: {}]
  %s1 = inlined_call_operand.hbm [shape: f32[4,32], index: 1, kind: input, shape index: {}]
  %s2 = inlined_call_operand.hbm [shape: f32[2,16,2,16,16], index: 2, kind: output, shape index: {}]
  %s3 = sld [smem:[#allocation0]]
  $region49: #{tpu_custom_call.1} parent=0
    _
  %s5 = ssub.s32 1, %s3
  %s6 = scalar_select 0, %s5, %s3
  $region1: #{tpu_custom_call.1} parent=0
    #allocation2 [shape = 'u8[8192]{0}', space=vmem, size = 0x2000, scoped, tag = 'input window, operand 0']
    #allocation3 [shape = 's32[2]{0}', space=sflag, size = 0x8, scoped, tag = 'scoped memory for tpu_custom_call.1']
    #allocation4 [shape = 's32[2]{0}', space=sflag, size = 0x8, scoped, tag = 'scoped memory for tpu_custom_call.1']
    #allocation5 [shape = 'u8[2048]{0}', space=vmem, size = 0x800, scoped, tag = 'input window, operand 1, single buffered']
    #allocation6 [shape = 's32[1]{0}', space=sflag, size = 0x4, scoped, tag = 'scoped memory for tpu_custom_call.1']
    #allocation7 [shape = 'u8[524288]{0}', space=vmem, size = 0x80000, scoped, tag = 'output window, operand 0']
    %7 = vsyncpa [#allocation3], 0
    %s8 = scalar_lea.sflag [#allocation3], 1
    %9 = vsyncpa %s8, 0
    %10 = vsyncpa [#allocation6], 0
    %11 = vsyncpa [#allocation4], 0
    %s12 = scalar_lea.sflag [#allocation4], 1
    %13 = vsyncpa %s12, 0
    loop: start=0, step=1, limit=4
    $region2: #{tpu_custom_call.1} parent=1 // loop_pre_header
      _
    $region3: #{tpu_custom_call.1} parent=1 // loop_header
      %s15 = sphi 0, %s19
      %p16 = scmp.ge.s32.totalorder %s15, 4
      %s22 = sphi 0, %s34
      %s23 = sphi 0, %s30
      %s24 = sphi 0, %s22
      %s25 = sphi 0, %s23
      %s26 = sphi 0, %s24
      %s27 = sphi 0, %s25
      %s39 = sphi 0, %s41
      %s42 = sphi 0, %s39
      %s43 = sphi 0, %s42
      %s59 = sphi 0, %s43
      %s63 = sphi 0, %s63
      %s65 = sphi 0, %s63
      %s66 = sphi 0, %s65
      %s80 = sphi 0, %s66
      %s88 = sphi 0, %s90
      %s91 = sphi 0, %s88
      %s92 = sphi 0, %s91
      %s108 = sphi 0, %s92
    $region4: #{tpu_custom_call.1} parent=1 // loop_header_branch
      %18 = sbr.rel (%p16) target = $region8
    $region5: #{tpu_custom_call.1} parent=1 // loop_body
      %s20 = ssub.s32 %s15, 1
      %s21 = ssub.s32 %s15, 2
      %s28 = sadd.s32 1, %s23
      %p29 = scmp.ge.s32.totalorder %s28, 1
      %s30 = scalar_select %p29, 0, %s28
      %s31 = sadd.s32 1, %s22
      %s32 = scalar_select %p29, %s31, %s22
      %p33 = scmp.ge.s32.totalorder %s32, 2
      %s34 = scalar_select %p33, 0, %s32
      %s35 = ssub.s32 %s22, %s34
      %s36 = ssub.s32 %s23, %s30
      %s37 = sor.u32 %s35, %s36
      %p38 = scmp.eq.s32.totalorder %s37, 0
      %s40 = sadd.s32 %s39, 1
      %s41 = scalar_select %p38, %s39, %s40
      %p44 = pneg %p38
      %p45 = scmp.eq.s32.totalorder %s15, 1
      %p46 = por %p44, %p45
      %p47 = scmp.ne.s32.totalorder %s39, %s42
      %p48 = scmp.eq.s32.totalorder %s15, 0
      %p49 = por %p47, %p48
      %p50 = scmp.ne.s32.totalorder %s39, %s42
      %p51 = scmp.eq.s32.totalorder %s20, 1
      %p52 = por %p50, %p51
      %p53 = scmp.ne.s32.totalorder %s42, %s43
      %p54 = scmp.eq.s32.totalorder %s20, 0
      %p55 = por %p53, %p54
      %p56 = scmp.ne.s32.totalorder %s42, %s43
      %p57 = scmp.eq.s32.totalorder %s21, 1
      %p58 = por %p56, %p57
      %p60 = scmp.ne.s32.totalorder %s43, %s59
      %p61 = scmp.eq.s32.totalorder %s21, 0
      %p62 = por %p60, %p61
      %s64 = sadd.s32 %s63, 1
      %p67 = scmp.eq.s32.totalorder %s15, 1
      %p68 = scmp.ne.s32.totalorder %s63, %s65
      %p69 = scmp.eq.s32.totalorder %s15, 0
      %p70 = por %p68, %p69
      %p71 = scmp.ne.s32.totalorder %s63, %s65
      %p72 = scmp.eq.s32.totalorder %s20, 1
      %p73 = por %p71, %p72
      %p74 = scmp.ne.s32.totalorder %s65, %s66
      %p75 = scmp.eq.s32.totalorder %s20, 0
      %p76 = por %p74, %p75
      %p77 = scmp.ne.s32.totalorder %s65, %s66
      %p78 = scmp.eq.s32.totalorder %s21, 1
      %p79 = por %p77, %p78
      %p81 = scmp.ne.s32.totalorder %s66, %s80
      %p82 = scmp.eq.s32.totalorder %s21, 0
      %p83 = por %p81, %p82
      %s84 = ssub.s32 %s22, %s34
      %s85 = ssub.s32 %s23, %s30
      %s86 = sor.u32 %s84, %s85
      %p87 = scmp.eq.s32.totalorder %s86, 0
      %s89 = sadd.s32 %s88, 1
      %s90 = scalar_select %p87, %s88, %s89
      %p93 = pneg %p87
      %p94 = scmp.eq.s32.totalorder %s15, 1
      %p95 = por %p93, %p94
      %p96 = scmp.ne.s32.totalorder %s88, %s91
      %p97 = scmp.eq.s32.totalorder %s15, 0
      %p98 = por %p96, %p97
      %p99 = scmp.ne.s32.totalorder %s88, %s91
      %p100 = scmp.eq.s32.totalorder %s20, 1
      %p101 = por %p99, %p100
      %p102 = scmp.ne.s32.totalorder %s91, %s92
      %p103 = scmp.eq.s32.totalorder %s20, 0
      %p104 = por %p102, %p103
      %p105 = scmp.ne.s32.totalorder %s91, %s92
      %p106 = scmp.eq.s32.totalorder %s21, 1
      %p107 = por %p105, %p106
      %p109 = scmp.ne.s32.totalorder %s92, %s108
      %p110 = scmp.eq.s32.totalorder %s21, 0
      %p111 = por %p109, %p110
      %p112 = scmp.le.s32.totalorder 1, %s15
      %p113 = scmp.lt.s32.totalorder %s15, 3
      %p114 = pnand %p112, %p113
      %p115 = pneg %p114
      // Predicated region
      $region9: #{tpu_custom_call.1} parent=5 // pred_check
        _
      $region10: #{tpu_custom_call.1} parent=5 // pred_check_branch
        %117 = sbr.rel (%p114) target = $region12
      $region11: #{tpu_custom_call.1} parent=5 // pred_region
        %s118 = ssub.s32 %s15, 1
        // Predicated region
        $region13: #{tpu_custom_call.1} parent=11 // pred_check
          %p119 = pneg %p76
        $region14: #{tpu_custom_call.1} parent=11 // pred_check_branch
          %121 = sbr.rel (%p119) target = $region16
        $region15: #{tpu_custom_call.1} parent=11 // pred_region
          %s123 = ssub.s32 64, 64
          %124 = vsyncadd [#allocation6], %s123
          %s126 = sshll.u32 [#allocation5], 4
          %s127 = int_to_ptr.vmem [resolvable:$true] %s126
          %129 = dma.hbm_to_vmem [thread:$0]  %s1, 64, %s127, [#allocation6]
        $region16: #{tpu_custom_call.1} parent=11 // pred_fallthru
          _
      $region12: #{tpu_custom_call.1} parent=5 // pred_fallthru
        _
      %p130 = scmp.lt.s32.totalorder %s15, 2
      // Predicated region
      $region17: #{tpu_custom_call.1} parent=5 // pred_check
        %p131 = pneg %p130
      $region18: #{tpu_custom_call.1} parent=5 // pred_check_branch
        %133 = sbr.rel (%p131) target = $region20
      $region19: #{tpu_custom_call.1} parent=5 // pred_region
        // Predicated region
        $region21: #{tpu_custom_call.1} parent=19 // pred_check
          %p134 = pneg %p49
        $region22: #{tpu_custom_call.1} parent=19 // pred_check_branch
          %136 = sbr.rel (%p134) target = $region24
        $region23: #{tpu_custom_call.1} parent=19 // pred_region
          %s137 = sand.u32 %s39, 1
          %s138 = scalar_lea.sflag [#allocation3], %s137
          %s139 = sand.u32 %s39, 1
          %s140 = smul.addr %s139, 8
          %s141 = scalar_lea.vmem [#allocation2], %s140
          %s142 = smul.u32 2, %s23
          %s144 = ssub.s32 128, 128
          %145 = vsyncadd %s138, %s144
          %s146 = smul.addr %s22, 2
          %s147 = sadd.s32 %s142, %s146
          %s148 = smul.addr %s147, 64
          %s149 = scalar_lea.hbm %s0, %s148
          %s151 = sshll.u32 %s141, 4
          %s152 = int_to_ptr.vmem [resolvable:$true] %s151
          %154 = dma.hbm_to_vmem [thread:$0]  %s149, 128, %s152, %s138
        $region24: #{tpu_custom_call.1} parent=19 // pred_fallthru
          _
      $region20: #{tpu_custom_call.1} parent=5 // pred_fallthru
        _
      %p155 = scmp.le.s32.totalorder 1, %s15
      %p156 = scmp.lt.s32.totalorder %s15, 3
      %p157 = pnand %p155, %p156
      %p158 = pneg %p157
      // Predicated region
      $region25: #{tpu_custom_call.1} parent=5 // pred_check
        _
      $region26: #{tpu_custom_call.1} parent=5 // pred_check_branch
        %160 = sbr.rel (%p157) target = $region28
      $region27: #{tpu_custom_call.1} parent=5 // pred_region
        %s161 = ssub.s32 %s15, 1
        %s162 = sand.u32 %s42, 1
        %s163 = scalar_lea.sflag [#allocation3], %s162
        %s164 = sand.u32 %s42, 1
        %s165 = smul.addr %s164, 8
        %s166 = scalar_lea.vmem [#allocation2], %s165
        // Predicated region
        $region29: #{tpu_custom_call.1} parent=27 // pred_check
          %p167 = pneg %p55
        $region30: #{tpu_custom_call.1} parent=27 // pred_check_branch
          %169 = sbr.rel (%p167) target = $region32
        $region31: #{tpu_custom_call.1} parent=27 // pred_region
          %170 = dma.done %s163, 128
        $region32: #{tpu_custom_call.1} parent=27 // pred_fallthru
          _
        // Predicated region
        $region33: #{tpu_custom_call.1} parent=27 // pred_check
          %p171 = pneg %p76
        $region34: #{tpu_custom_call.1} parent=27 // pred_check_branch
          %173 = sbr.rel (%p171) target = $region36
        $region35: #{tpu_custom_call.1} parent=27 // pred_region
          %174 = dma.done [#allocation6], 64
        $region36: #{tpu_custom_call.1} parent=27 // pred_fallthru
          _
        %s175 = sand.u32 %s42, 1
        %s176 = scalar_lea.sflag [#allocation3], %s175
        %s177 = sand.u32 %s42, 1
        %s178 = smul.addr %s177, 8
        %s179 = scalar_lea.vmem [#allocation2], %s178
        %p180 = pneg %p55
        %p181 = pneg %p52
        %p182 = pneg %p76
        %p183 = pneg %p73
        %p184 = pneg %p104
        %p185 = pneg %p101
        %s186 = sand.u32 %s91, 1
        %s187 = scalar_lea.sflag [#allocation4], %s186
        %s188 = sand.u32 %s91, 1
        %s189 = smul.addr %s188, 512
        %s190 = scalar_lea.vmem [#allocation7], %s189
        %s191 = smul.u32 2, %s25
        %s192 = smul.u32 16, %s25
        %v193 = vld [vmem:[#allocation5] sm:$0xf]
        %v194 = vld [vmem:[%s166] sm:$0xff]
        %v196 = vcombine.high %v194, %v194
        %198 = vxpose.xlu0.b32.start [1/16] %v194, 128
        %199 = vxpose.xlu0.b32.cont [2/16] 0.0, 128
        %200 = vxpose.xlu0.b32.cont [3/16] 0.0, 128
        %201 = vxpose.xlu0.b32.cont [4/16] 0.0, 128
        %202 = vxpose.xlu0.b32.cont [5/16] 0.0, 128
        %203 = vxpose.xlu0.b32.cont [6/16] 0.0, 128
        %204 = vxpose.xlu0.b32.cont [7/16] 0.0, 128
        %205 = vxpose.xlu0.b32.cont [8/16] 0.0, 128
        %206 = vxpose.xlu0.b32.cont [9/16] 0.0, 128
        %207 = vxpose.xlu0.b32.cont [10/16] 0.0, 128
        %208 = vxpose.xlu0.b32.cont [11/16] 0.0, 128
        %209 = vxpose.xlu0.b32.cont [12/16] 0.0, 128
        %210 = vxpose.xlu0.b32.cont [13/16] 0.0, 128
        %211 = vxpose.xlu0.b32.cont [14/16] 0.0, 128
        %212 = vxpose.xlu0.b32.cont [15/16] 0.0, 128
        %213 = vxpose.xlu0.b32.end [16/16] 0.0, 128
        %v214 = vpop.trf.xlu0
        %v215 = vpop.trf.xlu0
        %v216 = vpop.trf.xlu0
        %v217 = vpop.trf.xlu0
        %v218 = vpop.trf.xlu0
        %v219 = vpop.trf.xlu0
        %v220 = vpop.trf.xlu0
        %v221 = vpop.trf.xlu0
        %v222 = vpop.trf.xlu0
        %v223 = vpop.trf.xlu0
        %v224 = vpop.trf.xlu0
        %v225 = vpop.trf.xlu0
        %v226 = vpop.trf.xlu0
        %v227 = vpop.trf.xlu0
        %v228 = vpop.trf.xlu0
        %v229 = vpop.trf.xlu0
        %230 = vxpose.xlu0.b32.start [1/16] %v196, 128
        %231 = vxpose.xlu0.b32.cont [2/16] 0.0, 128
        %232 = vxpose.xlu0.b32.cont [3/16] 0.0, 128
        %233 = vxpose.xlu0.b32.cont [4/16] 0.0, 128
        %234 = vxpose.xlu0.b32.cont [5/16] 0.0, 128
        %235 = vxpose.xlu0.b32.cont [6/16] 0.0, 128
        %236 = vxpose.xlu0.b32.cont [7/16] 0.0, 128
        %237 = vxpose.xlu0.b32.cont [8/16] 0.0, 128
        %238 = vxpose.xlu0.b32.cont [9/16] 0.0, 128
        %239 = vxpose.xlu0.b32.cont [10/16] 0.0, 128
        %240 = vxpose.xlu0.b32.cont [11/16] 0.0, 128
        %241 = vxpose.xlu0.b32.cont [12/16] 0.0, 128
        %242 = vxpose.xlu0.b32.cont [13/16] 0.0, 128
        %243 = vxpose.xlu0.b32.cont [14/16] 0.0, 128
        %244 = vxpose.xlu0.b32.cont [15/16] 0.0, 128
        %245 = vxpose.xlu0.b32.end [16/16] 0.0, 128
        %v246 = vpop.trf.xlu0
        %v247 = vpop.trf.xlu0
        %v248 = vpop.trf.xlu0
        %v249 = vpop.trf.xlu0
        %v250 = vpop.trf.xlu0
        %v251 = vpop.trf.xlu0
        %v252 = vpop.trf.xlu0
        %v253 = vpop.trf.xlu0
        %v254 = vpop.trf.xlu0
        %v255 = vpop.trf.xlu0
        %v256 = vpop.trf.xlu0
        %v257 = vpop.trf.xlu0
        %v258 = vpop.trf.xlu0
        %v259 = vpop.trf.xlu0
        %v260 = vpop.trf.xlu0
        %v261 = vpop.trf.xlu0
        %vm262 = vcmask 31744
        %v264 = vsel %vm262, %v214, 0
        %v267 = vsel %vm262, %v215, 0
        %v270 = vsel %vm262, %v216, 0
        %v273 = vsel %vm262, %v217, 0
        %v276 = vsel %vm262, %v218, 0
        %v279 = vsel %vm262, %v219, 0
        %v282 = vsel %vm262, %v220, 0
        %v285 = vsel %vm262, %v221, 0
        %v288 = vsel %vm262, %v222, 0
        %v291 = vsel %vm262, %v223, 0
        %v294 = vsel %vm262, %v224, 0
        %v297 = vsel %vm262, %v225, 0
        %v300 = vsel %vm262, %v226, 0
        %v303 = vsel %vm262, %v227, 0
        %v306 = vsel %vm262, %v228, 0
        %v309 = vsel %vm262, %v229, 0
        %v312 = vsel %vm262, %v246, 0
        %v315 = vsel %vm262, %v247, 0
        %v318 = vsel %vm262, %v248, 0
        %v321 = vsel %vm262, %v249, 0
        %v324 = vsel %vm262, %v250, 0
        %v327 = vsel %vm262, %v251, 0
        %v330 = vsel %vm262, %v252, 0
        %v333 = vsel %vm262, %v253, 0
        %v336 = vsel %vm262, %v254, 0
        %v339 = vsel %vm262, %v255, 0
        %v342 = vsel %vm262, %v256, 0
        %v345 = vsel %vm262, %v257, 0
        %v348 = vsel %vm262, %v258, 0
        %v351 = vsel %vm262, %v259, 0
        %v354 = vsel %vm262, %v260, 0
        %v357 = vsel %vm262, %v261, 0
        %vm359 = vcmask 1043456
        %v361 = vsel %vm359, %v193, 0
        %363 = vmatprep.subr.mxu0 0.0
        %364 = vmatpush1.msra.mxu0 %v361
        %365 = vmatprep.subr.mxu0 0.0
        %366 = vmatpush1.msra.mxu0 0.0
        %367 = vmatprep.subr.mxu0 0.0
        %368 = vmatpush1.msra.mxu0 0.0
        %369 = vmatprep.subr.mxu0 0.0
        %370 = vmatpush1.msra.mxu0 0.0
        %371 = vmatprep.subr.mxu0 0.0
        %372 = vmatpush1.msra.mxu0 0.0
        %373 = vmatprep.subr.mxu0 0.0
        %374 = vmatpush1.msra.mxu0 0.0
        %375 = vmatprep.subr.mxu0 0.0
        %376 = vmatpush1.msra.mxu0 0.0
        %377 = vmatprep.subr.mxu0 0.0
        %378 = vmatpush1.msra.mxu0 0.0
        %379 = vmatprep.subr.mxu0 0.0
        %380 = vmatpush1.msra.mxu0 0.0
        %381 = vmatprep.subr.mxu0 0.0
        %382 = vmatpush1.msra.mxu0 0.0
        %383 = vmatprep.subr.mxu0 0.0
        %384 = vmatpush1.msra.mxu0 0.0
        %385 = vmatprep.subr.mxu0 0.0
        %386 = vmatpush1.msra.mxu0 0.0
        %387 = vmatprep.subr.mxu0 0.0
        %388 = vmatpush1.msra.mxu0 0.0
        %389 = vmatprep.subr.mxu0 0.0
        %390 = vmatpush1.msra.mxu0 0.0
        %391 = vmatprep.subr.mxu0 0.0
        %392 = vmatpush1.msra.mxu0 0.0
        %393 = vmatprep.subr.mxu0 0.0
        %394 = vmatpush1.msra.mxu0 0.0
        %395 = vmatprep.subr.mxu0 0.0
        %396 = vmatpush1.msra.mxu0 0.0
        %397 = vmatprep.subr.mxu0 0.0
        %398 = vmatpush1.msra.mxu0 0.0
        %399 = vmatprep.subr.mxu0 0.0
        %400 = vmatpush1.msra.mxu0 0.0
        %401 = vmatprep.subr.mxu0 0.0
        %402 = vmatpush1.msra.mxu0 0.0
        %403 = vmatprep.subr.mxu0 0.0
        %404 = vmatpush1.msra.mxu0 0.0
        %405 = vmatprep.subr.mxu0 0.0
        %406 = vmatpush1.msra.mxu0 0.0
        %407 = vmatprep.subr.mxu0 0.0
        %408 = vmatpush1.msra.mxu0 0.0
        %409 = vmatprep.subr.mxu0 0.0
        %410 = vmatpush1.msra.mxu0 0.0
        %411 = vmatprep.subr.mxu0 0.0
        %412 = vmatpush1.msra.mxu0 0.0
        %413 = vmatprep.subr.mxu0 0.0
        %414 = vmatpush1.msra.mxu0 0.0
        %415 = vmatprep.subr.mxu0 0.0
        %416 = vmatpush1.msra.mxu0 0.0
        %417 = vmatprep.subr.mxu0 0.0
        %418 = vmatpush1.msra.mxu0 0.0
        %419 = vmatprep.subr.mxu0 0.0
        %420 = vmatpush1.msra.mxu0 0.0
        %421 = vmatprep.subr.mxu0 0.0
        %422 = vmatpush1.msra.mxu0 0.0
        %423 = vmatprep.subr.mxu0 0.0
        %424 = vmatpush1.msra.mxu0 0.0
        %425 = vmatprep.subr.mxu0 0.0
        %426 = vmatpush1.msra.mxu0 0.0
        %427 = vmatprep.mubr.f32.mxu0 0.0
        %428 = vmatmul.mubr.f32.gmra.mrb[0].mxu0 %v264
        %v429 = vpop.f32.mrb[0].mxu0
        %v430 = vadd.f32 0.0, %v429
        %v431 = vpop.f32.mrb[0].mxu0
        %432 = vmatprep.mubr.f32.mxu0 0.0
        %433 = vmatmul.mubr.f32.gmra.mrb[0].mxu0 %v267
        %v434 = vpop.f32.mrb[0].mxu0
        %v435 = vadd.f32 0.0, %v434
        %v436 = vpop.f32.mrb[0].mxu0
        %437 = vmatprep.mubr.f32.mxu0 0.0
        %438 = vmatmul.mubr.f32.gmra.mrb[0].mxu0 %v270
        %v439 = vpop.f32.mrb[0].mxu0
        %v440 = vadd.f32 0.0, %v439
        %v441 = vpop.f32.mrb[0].mxu0
        %442 = vmatprep.mubr.f32.mxu0 0.0
        %443 = vmatmul.mubr.f32.gmra.mrb[0].mxu0 %v273
        %v444 = vpop.f32.mrb[0].mxu0
        %v445 = vadd.f32 0.0, %v444
        %v446 = vpop.f32.mrb[0].mxu0
        %447 = vmatprep.mubr.f32.mxu0 0.0
        %448 = vmatmul.mubr.f32.gmra.mrb[0].mxu0 %v276
        %v449 = vpop.f32.mrb[0].mxu0
        %v450 = vadd.f32 0.0, %v449
        %v451 = vpop.f32.mrb[0].mxu0
        %452 = vmatprep.mubr.f32.mxu0 0.0
        %453 = vmatmul.mubr.f32.gmra.mrb[0].mxu0 %v279
        %v454 = vpop.f32.mrb[0].mxu0
        %v455 = vadd.f32 0.0, %v454
        %v456 = vpop.f32.mrb[0].mxu0
        %457 = vmatprep.mubr.f32.mxu0 0.0
        %458 = vmatmul.mubr.f32.gmra.mrb[0].mxu0 %v282
        %v459 = vpop.f32.mrb[0].mxu0
        %v460 = vadd.f32 0.0, %v459
        %v461 = vpop.f32.mrb[0].mxu0
        %462 = vmatprep.mubr.f32.mxu0 0.0
        %463 = vmatmul.mubr.f32.gmra.mrb[0].mxu0 %v285
        %v464 = vpop.f32.mrb[0].mxu0
        %v465 = vadd.f32 0.0, %v464
        %v466 = vpop.f32.mrb[0].mxu0
        %467 = vmatprep.mubr.f32.mxu0 0.0
        %468 = vmatmul.mubr.f32.gmra.mrb[0].mxu0 %v288
        %v469 = vpop.f32.mrb[0].mxu0
        %v470 = vadd.f32 0.0, %v469
        %v471 = vpop.f32.mrb[0].mxu0
        %472 = vmatprep.mubr.f32.mxu0 0.0
        %473 = vmatmul.mubr.f32.gmra.mrb[0].mxu0 %v291
        %v474 = vpop.f32.mrb[0].mxu0
        %v475 = vadd.f32 0.0, %v474
        %v476 = vpop.f32.mrb[0].mxu0
        %477 = vmatprep.mubr.f32.mxu0 0.0
        %478 = vmatmul.mubr.f32.gmra.mrb[0].mxu0 %v294
        %v479 = vpop.f32.mrb[0].mxu0
        %v480 = vadd.f32 0.0, %v479
        %v481 = vpop.f32.mrb[0].mxu0
        %482 = vmatprep.mubr.f32.mxu0 0.0
        %483 = vmatmul.mubr.f32.gmra.mrb[0].mxu0 %v297
        %v484 = vpop.f32.mrb[0].mxu0
        %v485 = vadd.f32 0.0, %v484
        %v486 = vpop.f32.mrb[0].mxu0
        %487 = vmatprep.mubr.f32.mxu0 0.0
        %488 = vmatmul.mubr.f32.gmra.mrb[0].mxu0 %v300
        %v489 = vpop.f32.mrb[0].mxu0
        %v490 = vadd.f32 0.0, %v489
        %v491 = vpop.f32.mrb[0].mxu0
        %492 = vmatprep.mubr.f32.mxu0 0.0
        %493 = vmatmul.mubr.f32.gmra.mrb[0].mxu0 %v303
        %v494 = vpop.f32.mrb[0].mxu0
        %v495 = vadd.f32 0.0, %v494
        %v496 = vpop.f32.mrb[0].mxu0
        %497 = vmatprep.mubr.f32.mxu0 0.0
        %498 = vmatmul.mubr.f32.gmra.mrb[0].mxu0 %v306
        %v499 = vpop.f32.mrb[0].mxu0
        %v500 = vadd.f32 0.0, %v499
        %v501 = vpop.f32.mrb[0].mxu0
        %502 = vmatprep.mubr.f32.mxu0 0.0
        %503 = vmatmul.mubr.f32.gmra.mrb[0].mxu0 %v309
        %v504 = vpop.f32.mrb[0].mxu0
        %v505 = vadd.f32 0.0, %v504
        %v506 = vpop.f32.mrb[0].mxu0
        %507 = vmatprep.mubr.f32.mxu0 0.0
        %508 = vmatmul.mubr.f32.gmra.mrb[0].mxu0 %v312
        %v509 = vpop.f32.mrb[0].mxu0
        %v510 = vadd.f32 0.0, %v509
        %v511 = vpop.f32.mrb[0].mxu0
        %512 = vmatprep.mubr.f32.mxu0 0.0
        %513 = vmatmul.mubr.f32.gmra.mrb[0].mxu0 %v315
        %v514 = vpop.f32.mrb[0].mxu0
        %v515 = vadd.f32 0.0, %v514
        %v516 = vpop.f32.mrb[0].mxu0
        %517 = vmatprep.mubr.f32.mxu0 0.0
        %518 = vmatmul.mubr.f32.gmra.mrb[0].mxu0 %v318
        %v519 = vpop.f32.mrb[0].mxu0
        %v520 = vadd.f32 0.0, %v519
        %v521 = vpop.f32.mrb[0].mxu0
        %522 = vmatprep.mubr.f32.mxu0 0.0
        %523 = vmatmul.mubr.f32.gmra.mrb[0].mxu0 %v321
        %v524 = vpop.f32.mrb[0].mxu0
        %v525 = vadd.f32 0.0, %v524
        %v526 = vpop.f32.mrb[0].mxu0
        %527 = vmatprep.mubr.f32.mxu0 0.0
        %528 = vmatmul.mubr.f32.gmra.mrb[0].mxu0 %v324
        %v529 = vpop.f32.mrb[0].mxu0
        %v530 = vadd.f32 0.0, %v529
        %v531 = vpop.f32.mrb[0].mxu0
        %532 = vmatprep.mubr.f32.mxu0 0.0
        %533 = vmatmul.mubr.f32.gmra.mrb[0].mxu0 %v327
        %v534 = vpop.f32.mrb[0].mxu0
        %v535 = vadd.f32 0.0, %v534
        %v536 = vpop.f32.mrb[0].mxu0
        %537 = vmatprep.mubr.f32.mxu0 0.0
        %538 = vmatmul.mubr.f32.gmra.mrb[0].mxu0 %v330
        %v539 = vpop.f32.mrb[0].mxu0
        %v540 = vadd.f32 0.0, %v539
        %v541 = vpop.f32.mrb[0].mxu0
        %542 = vmatprep.mubr.f32.mxu0 0.0
        %543 = vmatmul.mubr.f32.gmra.mrb[0].mxu0 %v333
        %v544 = vpop.f32.mrb[0].mxu0
        %v545 = vadd.f32 0.0, %v544
        %v546 = vpop.f32.mrb[0].mxu0
        %547 = vmatprep.mubr.f32.mxu0 0.0
        %548 = vmatmul.mubr.f32.gmra.mrb[0].mxu0 %v336
        %v549 = vpop.f32.mrb[0].mxu0
        %v550 = vadd.f32 0.0, %v549
        %v551 = vpop.f32.mrb[0].mxu0
        %552 = vmatprep.mubr.f32.mxu0 0.0
        %553 = vmatmul.mubr.f32.gmra.mrb[0].mxu0 %v339
        %v554 = vpop.f32.mrb[0].mxu0
        %v555 = vadd.f32 0.0, %v554
        %v556 = vpop.f32.mrb[0].mxu0
        %557 = vmatprep.mubr.f32.mxu0 0.0
        %558 = vmatmul.mubr.f32.gmra.mrb[0].mxu0 %v342
        %v559 = vpop.f32.mrb[0].mxu0
        %v560 = vadd.f32 0.0, %v559
        %v561 = vpop.f32.mrb[0].mxu0
        %562 = vmatprep.mubr.f32.mxu0 0.0
        %563 = vmatmul.mubr.f32.gmra.mrb[0].mxu0 %v345
        %v564 = vpop.f32.mrb[0].mxu0
        %v565 = vadd.f32 0.0, %v564
        %v566 = vpop.f32.mrb[0].mxu0
        %567 = vmatprep.mubr.f32.mxu0 0.0
        %568 = vmatmul.mubr.f32.gmra.mrb[0].mxu0 %v348
        %v569 = vpop.f32.mrb[0].mxu0
        %v570 = vadd.f32 0.0, %v569
        %v571 = vpop.f32.mrb[0].mxu0
        %572 = vmatprep.mubr.f32.mxu0 0.0
        %573 = vmatmul.mubr.f32.gmra.mrb[0].mxu0 %v351
        %v574 = vpop.f32.mrb[0].mxu0
        %v575 = vadd.f32 0.0, %v574
        %v576 = vpop.f32.mrb[0].mxu0
        %577 = vmatprep.mubr.f32.mxu0 0.0
        %578 = vmatmul.mubr.f32.gmra.mrb[0].mxu0 %v354
        %v579 = vpop.f32.mrb[0].mxu0
        %v580 = vadd.f32 0.0, %v579
        %v581 = vpop.f32.mrb[0].mxu0
        %582 = vmatprep.mubr.f32.mxu0 0.0
        %583 = vmatmul.mubr.f32.gmra.mrb[0].mxu0 %v357
        %v584 = vpop.f32.mrb[0].mxu0
        %v585 = vadd.f32 0.0, %v584
        %v586 = vpop.f32.mrb[0].mxu0
        %587 = vdwg.mxu0
        %vm588 = vcmask 130048
        %589 = vst.msk [vmem:[%s190] sm:$0xff] %vm588, %v430
        %590 = vst.msk [vmem:[%s190 + $0x8] sm:$0xff] %vm588, %v435
        %591 = vst.msk [vmem:[%s190 + $0x20] sm:$0xff] %vm588, %v440
        %592 = vst.msk [vmem:[%s190 + $0x28] sm:$0xff] %vm588, %v445
        %593 = vst.msk [vmem:[%s190 + $0x40] sm:$0xff] %vm588, %v450
        %594 = vst.msk [vmem:[%s190 + $0x48] sm:$0xff] %vm588, %v455
        %595 = vst.msk [vmem:[%s190 + $0x60] sm:$0xff] %vm588, %v460
        %596 = vst.msk [vmem:[%s190 + $0x68] sm:$0xff] %vm588, %v465
        %597 = vst.msk [vmem:[%s190 + $0x80] sm:$0xff] %vm588, %v470
        %598 = vst.msk [vmem:[%s190 + $0x88] sm:$0xff] %vm588, %v475
        %599 = vst.msk [vmem:[%s190 + $0xa0] sm:$0xff] %vm588, %v480
        %600 = vst.msk [vmem:[%s190 + $0xa8] sm:$0xff] %vm588, %v485
        %601 = vst.msk [vmem:[%s190 + $0xc0] sm:$0xff] %vm588, %v490
        %602 = vst.msk [vmem:[%s190 + $0xc8] sm:$0xff] %vm588, %v495
        %603 = vst.msk [vmem:[%s190 + $0xe0] sm:$0xff] %vm588, %v500
        %604 = vst.msk [vmem:[%s190 + $0xe8] sm:$0xff] %vm588, %v505
        %605 = vst.msk [vmem:[%s190 + $0x100] sm:$0xff] %vm588, %v510
        %606 = vst.msk [vmem:[%s190 + $0x108] sm:$0xff] %vm588, %v515
        %607 = vst.msk [vmem:[%s190 + $0x120] sm:$0xff] %vm588, %v520
        %608 = vst.msk [vmem:[%s190 + $0x128] sm:$0xff] %vm588, %v525
        %609 = vst.msk [vmem:[%s190 + $0x140] sm:$0xff] %vm588, %v530
        %610 = vst.msk [vmem:[%s190 + $0x148] sm:$0xff] %vm588, %v535
        %611 = vst.msk [vmem:[%s190 + $0x160] sm:$0xff] %vm588, %v540
        %612 = vst.msk [vmem:[%s190 + $0x168] sm:$0xff] %vm588, %v545
        %613 = vst.msk [vmem:[%s190 + $0x180] sm:$0xff] %vm588, %v550
        %614 = vst.msk [vmem:[%s190 + $0x188] sm:$0xff] %vm588, %v555
        %615 = vst.msk [vmem:[%s190 + $0x1a0] sm:$0xff] %vm588, %v560
        %616 = vst.msk [vmem:[%s190 + $0x1a8] sm:$0xff] %vm588, %v565
        %617 = vst.msk [vmem:[%s190 + $0x1c0] sm:$0xff] %vm588, %v570
        %618 = vst.msk [vmem:[%s190 + $0x1c8] sm:$0xff] %vm588, %v575
        %619 = vst.msk [vmem:[%s190 + $0x1e0] sm:$0xff] %vm588, %v580
        %620 = vst.msk [vmem:[%s190 + $0x1e8] sm:$0xff] %vm588, %v585
        %653 = vrot.lane.b32.xlu0 %v430, 112
        %v654 = vpop.permute.xlu0 %653
        %655 = vrot.lane.b32.xlu0 %v435, 112
        %v656 = vpop.permute.xlu0 %655
        %657 = vrot.lane.b32.xlu0 %v440, 112
        %v658 = vpop.permute.xlu0 %657
        %659 = vrot.lane.b32.xlu0 %v445, 112
        %v660 = vpop.permute.xlu0 %659
        %661 = vrot.lane.b32.xlu0 %v450, 112
        %v662 = vpop.permute.xlu0 %661
        %663 = vrot.lane.b32.xlu0 %v455, 112
        %v664 = vpop.permute.xlu0 %663
        %665 = vrot.lane.b32.xlu0 %v460, 112
        %v666 = vpop.permute.xlu0 %665
        %667 = vrot.lane.b32.xlu0 %v465, 112
        %v668 = vpop.permute.xlu0 %667
        %669 = vrot.lane.b32.xlu0 %v470, 112
        %v670 = vpop.permute.xlu0 %669
        %671 = vrot.lane.b32.xlu0 %v475, 112
        %v672 = vpop.permute.xlu0 %671
        %673 = vrot.lane.b32.xlu0 %v480, 112
        %v674 = vpop.permute.xlu0 %673
        %675 = vrot.lane.b32.xlu0 %v485, 112
        %v676 = vpop.permute.xlu0 %675
        %677 = vrot.lane.b32.xlu0 %v490, 112
        %v678 = vpop.permute.xlu0 %677
        %679 = vrot.lane.b32.xlu0 %v495, 112
        %v680 = vpop.permute.xlu0 %679
        %681 = vrot.lane.b32.xlu0 %v500, 112
        %v682 = vpop.permute.xlu0 %681
        %683 = vrot.lane.b32.xlu0 %v505, 112
        %v684 = vpop.permute.xlu0 %683
        %685 = vrot.lane.b32.xlu0 %v510, 112
        %v686 = vpop.permute.xlu0 %685
        %687 = vrot.lane.b32.xlu0 %v515, 112
        %v688 = vpop.permute.xlu0 %687
        %689 = vrot.lane.b32.xlu0 %v520, 112
        %v690 = vpop.permute.xlu0 %689
        %691 = vrot.lane.b32.xlu0 %v525, 112
        %v692 = vpop.permute.xlu0 %691
        %693 = vrot.lane.b32.xlu0 %v530, 112
        %v694 = vpop.permute.xlu0 %693
        %695 = vrot.lane.b32.xlu0 %v535, 112
        %v696 = vpop.permute.xlu0 %695
        %697 = vrot.lane.b32.xlu0 %v540, 112
        %v698 = vpop.permute.xlu0 %697
        %699 = vrot.lane.b32.xlu0 %v545, 112
        %v700 = vpop.permute.xlu0 %699
        %701 = vrot.lane.b32.xlu0 %v550, 112
        %v702 = vpop.permute.xlu0 %701
        %703 = vrot.lane.b32.xlu0 %v555, 112
        %v704 = vpop.permute.xlu0 %703
        %705 = vrot.lane.b32.xlu0 %v560, 112
        %v706 = vpop.permute.xlu0 %705
        %707 = vrot.lane.b32.xlu0 %v565, 112
        %v708 = vpop.permute.xlu0 %707
        %709 = vrot.lane.b32.xlu0 %v570, 112
        %v710 = vpop.permute.xlu0 %709
        %711 = vrot.lane.b32.xlu0 %v575, 112
        %v712 = vpop.permute.xlu0 %711
        %713 = vrot.lane.b32.xlu0 %v580, 112
        %v714 = vpop.permute.xlu0 %713
        %715 = vrot.lane.b32.xlu0 %v585, 112
        %v716 = vpop.permute.xlu0 %715
        %s749 = scalar_lea.vmem %s190, 16 [#allocation7]
        %750 = vst.msk [vmem:[%s749] sm:$0xff] %vm588, %v654
        %751 = vst.msk [vmem:[%s749 + $0x8] sm:$0xff] %vm588, %v656
        %752 = vst.msk [vmem:[%s749 + $0x20] sm:$0xff] %vm588, %v658
        %753 = vst.msk [vmem:[%s749 + $0x28] sm:$0xff] %vm588, %v660
        %754 = vst.msk [vmem:[%s749 + $0x40] sm:$0xff] %vm588, %v662
        %755 = vst.msk [vmem:[%s749 + $0x48] sm:$0xff] %vm588, %v664
        %756 = vst.msk [vmem:[%s749 + $0x60] sm:$0xff] %vm588, %v666
        %757 = vst.msk [vmem:[%s749 + $0x68] sm:$0xff] %vm588, %v668
        %758 = vst.msk [vmem:[%s749 + $0x80] sm:$0xff] %vm588, %v670
        %759 = vst.msk [vmem:[%s749 + $0x88] sm:$0xff] %vm588, %v672
        %760 = vst.msk [vmem:[%s749 + $0xa0] sm:$0xff] %vm588, %v674
        %761 = vst.msk [vmem:[%s749 + $0xa8] sm:$0xff] %vm588, %v676
        %762 = vst.msk [vmem:[%s749 + $0xc0] sm:$0xff] %vm588, %v678
        %763 = vst.msk [vmem:[%s749 + $0xc8] sm:$0xff] %vm588, %v680
        %764 = vst.msk [vmem:[%s749 + $0xe0] sm:$0xff] %vm588, %v682
        %765 = vst.msk [vmem:[%s749 + $0xe8] sm:$0xff] %vm588, %v684
        %766 = vst.msk [vmem:[%s749 + $0x100] sm:$0xff] %vm588, %v686
        %767 = vst.msk [vmem:[%s749 + $0x108] sm:$0xff] %vm588, %v688
        %768 = vst.msk [vmem:[%s749 + $0x120] sm:$0xff] %vm588, %v690
        %769 = vst.msk [vmem:[%s749 + $0x128] sm:$0xff] %vm588, %v692
        %770 = vst.msk [vmem:[%s749 + $0x140] sm:$0xff] %vm588, %v694
        %771 = vst.msk [vmem:[%s749 + $0x148] sm:$0xff] %vm588, %v696
        %772 = vst.msk [vmem:[%s749 + $0x160] sm:$0xff] %vm588, %v698
        %773 = vst.msk [vmem:[%s749 + $0x168] sm:$0xff] %vm588, %v700
        %774 = vst.msk [vmem:[%s749 + $0x180] sm:$0xff] %vm588, %v702
        %775 = vst.msk [vmem:[%s749 + $0x188] sm:$0xff] %vm588, %v704
        %776 = vst.msk [vmem:[%s749 + $0x1a0] sm:$0xff] %vm588, %v706
        %777 = vst.msk [vmem:[%s749 + $0x1a8] sm:$0xff] %vm588, %v708
        %778 = vst.msk [vmem:[%s749 + $0x1c0] sm:$0xff] %vm588, %v710
        %779 = vst.msk [vmem:[%s749 + $0x1c8] sm:$0xff] %vm588, %v712
        %780 = vst.msk [vmem:[%s749 + $0x1e0] sm:$0xff] %vm588, %v714
        %781 = vst.msk [vmem:[%s749 + $0x1e8] sm:$0xff] %vm588, %v716
        %s782 = sand.u32 %s91, 1
        %s783 = scalar_lea.sflag [#allocation4], %s782
        %s784 = sand.u32 %s91, 1
        %s785 = smul.addr %s784, 512
        %s786 = scalar_lea.vmem [#allocation7], %s785
        // Predicated region
        $region37: #{tpu_custom_call.1} parent=27 // pred_check
          %p787 = pneg %p101
        $region38: #{tpu_custom_call.1} parent=27 // pred_check_branch
          %789 = sbr.rel (%p787) target = $region40
        $region39: #{tpu_custom_call.1} parent=27 // pred_region
          %s790 = smul.u32 16, %s25
          %s792 = ssub.s32 8192, 8192
          %793 = vsyncadd %s783, %s792
          %s794 = smul.addr %s790, 4
          %s795 = smul.addr %s24, 64
          %s796 = sadd.s32 %s794, %s795
          %s797 = smul.addr %s796, 128
          %s798 = scalar_lea.hbm %s2, %s797
          %s799 = sshll.u32 %s786, 4
          %s800 = int_to_ptr.vmem [resolvable:$true] %s799
          %805 = dma.vmem_to_hbm [thread:$0]  %s800, 8192, %s798, %s783, 128, 128, 8
        $region40: #{tpu_custom_call.1} parent=27 // pred_fallthru
          _
      $region28: #{tpu_custom_call.1} parent=5 // pred_fallthru
        _
      %p806 = scmp.le.s32.totalorder 2, %s15
      // Predicated region
      $region41: #{tpu_custom_call.1} parent=5 // pred_check
        %p807 = pneg %p806
      $region42: #{tpu_custom_call.1} parent=5 // pred_check_branch
        %809 = sbr.rel (%p807) target = $region44
      $region43: #{tpu_custom_call.1} parent=5 // pred_region
        %s810 = ssub.s32 %s15, 2
        // Predicated region
        $region45: #{tpu_custom_call.1} parent=43 // pred_check
          %p811 = pneg %p107
        $region46: #{tpu_custom_call.1} parent=43 // pred_check_branch
          %813 = sbr.rel (%p811) target = $region48
        $region47: #{tpu_custom_call.1} parent=43 // pred_region
          %s814 = sand.u32 %s92, 1
          %s815 = scalar_lea.sflag [#allocation4], %s814
          %s816 = sand.u32 %s92, 1
          %s817 = smul.addr %s816, 512
          %s818 = scalar_lea.vmem [#allocation7], %s817
          %819 = dma.done %s815, 8192
        $region48: #{tpu_custom_call.1} parent=43 // pred_fallthru
          _
      $region44: #{tpu_custom_call.1} parent=5 // pred_fallthru
        _
    $region6: #{tpu_custom_call.1} parent=1 // loop_footer
      %s19 = sadd.s32 1, %s15
    $region7: #{tpu_custom_call.1} parent=1 // loop_footer_branch
      %14 = sbr.rel target = $region3
    $region8: #{tpu_custom_call.1} parent=1 // loop_exit
      _
    %820 = vsyncpa [#allocation3], 1
    %s821 = scalar_lea.sflag [#allocation3], 1
    %822 = vsyncpa %s821, 1
    %823 = vsyncpa [#allocation6], 1
    %824 = vsyncpa [#allocation4], 1
    %s825 = scalar_lea.sflag [#allocation4], 1
    %826 = vsyncpa %s825, 1

</llo_original>
